<compile_context>
chip_gen: v6e
topology: v6e:2x2x1
jax: 0.10.0
libtpu: 0.0.40
codegen_flags: <defaults>
</compile_context>

<pallas_src>
import jax
import jax.numpy as jnp
from jax.experimental import pallas as pl
from jax.experimental.pallas import tpu as pltpu


def _round_up(n, m):
    return ((n + m - 1) // m) * m


# ----------------------------------------------------------------------
# Kernel
# ----------------------------------------------------------------------
def _mlp_kernel(x_ref, w1_ref, b1_ref, w23_ref, b23_ref, heads_ref):
    # x tile: (TB, F). Cast to the MXU operand dtype in-kernel (cheap VPU
    # work under DMA slack) instead of a separate XLA pass over x in HBM.
    x = x_ref[...].astype(w1_ref.dtype)

    # Hidden layer: MXU matmul with f32 accumulation; bias + ReLU on the VPU.
    h = jnp.dot(x, w1_ref[...], preferred_element_type=jnp.float32)
    h = jnp.maximum(h + b1_ref[...], 0.0)               # (TB, Hp) + (1, Hp)

    # Fused heads: one matmul producing (TB, OPp) = [mu || log_var || pad].
    heads = jnp.dot(h.astype(w23_ref.dtype), w23_ref[...],
                    preferred_element_type=jnp.float32)
    heads_ref[...] = (heads + b23_ref[...]).astype(heads_ref.dtype)


# ----------------------------------------------------------------------
# Device / tiling heuristics
# ----------------------------------------------------------------------
def _device_info():
    """Return (physical VMEM bytes per TensorCore, TensorCores per chip)."""
    vmem_bytes = 128 << 20
    cores = 1
    try:
        kind = jax.devices()[0].device_kind.lower()
        if "v7" in kind or "tpu7" in kind:
            vmem_bytes, cores = 64 << 20, 2
        elif "v4" in kind or "v5p" in kind:
            cores = 2                                   # megacore chips
    except Exception:
        pass
    try:
        v = pltpu.get_tpu_info().vmem_capacity_bytes
        if v and v >= (16 << 20):
            vmem_bytes = v
    except Exception:
        pass
    return vmem_bytes, cores


def _choose_tb(B, per_row_bytes, fixed_bytes, vmem_budget, num_cores):
    """Largest batch tile that (a) is a multiple of 8 or the full batch,
    (b) divides B, (c) fits the VMEM budget, and (d) on 2-TC chips gives an
    even grid step count >= 2 when possible (so "parallel" sharding keeps
    both TensorCores busy). Single-TC chips take the largest tile even if
    that means a single grid step (per-step overhead ~0.35 us)."""
    if B <= 8:
        return B
    budget_rows = max(8, (vmem_budget - fixed_bytes) // max(per_row_bytes, 1))
    cands = []
    if B % 8 == 0 and B <= budget_rows and B <= 2048:
        cands.append(B)                                 # whole batch, 1 step
    for c in (2048, 1024, 512, 256, 128, 64, 32, 16, 8):
        if B % c == 0 and c <= budget_rows and c not in cands:
            cands.append(c)
    if not cands:
        return 8 if B % 8 == 0 else B                   # last resort
    if num_cores >= 2:
        for c in cands:
            steps = B // c
            if steps >= 2 and steps % 2 == 0:
                return c
    return cands[0]


# ----------------------------------------------------------------------
# Parameter prep (run ONCE, hoisted out of the forward path)
# ----------------------------------------------------------------------
def prepare_params(w1, b1, w2, b2, w3, b3, *, matmul_dtype=jnp.bfloat16):
    """One-time parameter preparation.

    * Fuses the two head weights/biases into a single [H, 2*O] matmul.
    * Zero-pads H and 2*O up to multiples of 128 so all matmuls and the
      output store are lane-dense (exact: padded rows/cols are zero).
    * Casts MXU weight operands to `matmul_dtype` (bf16 default; None keeps
      f32). Biases stay f32 (added to the f32 accumulator).
    """
    F, H = w1.shape
    O = w2.shape[1]
    Hp = _round_up(H, 128)
    OPp = _round_up(2 * O, 128)
    w_dtype = matmul_dtype if matmul_dtype is not None else w1.dtype

    w1p = jnp.zeros((F, Hp), w_dtype).at[:, :H].set(w1.astype(w_dtype))
    b1p = jnp.zeros((1, Hp), jnp.float32).at[0, :H].set(b1.astype(jnp.float32))

    w23 = jnp.concatenate([w2, w3], axis=1).astype(w_dtype)          # (H, 2O)
    w23p = jnp.zeros((Hp, OPp), w_dtype).at[:H, :2 * O].set(w23)
    b23 = jnp.concatenate([b2, b3], axis=0).astype(jnp.float32)
    b23p = jnp.zeros((1, OPp), jnp.float32).at[0, :2 * O].set(b23)

    return {"w1": w1p, "b1": b1p, "w23": w23p, "b23": b23p,
            "num_features": F, "num_hidden": H, "num_outputs": O}


# ----------------------------------------------------------------------
# Forward wrapper
# ----------------------------------------------------------------------
def gaussian_noise_mlp_forward(x, params, *, tb=None, out_dtype=None):
    """Heteroscedastic MLP forward. x: [B, F]. Returns (mu, log_var), [B, O].

    `params` must come from prepare_params(). Its dims are Python ints; if
    jitting this function, close over `params` rather than passing it as a
    traced argument.
    """
    B, F = x.shape
    assert F == params["num_features"]
    O = params["num_outputs"]
    w1p, b1p, w23p, b23p = params["w1"], params["b1"], params["w23"], params["b23"]
    Hp = w1p.shape[1]
    OPp = w23p.shape[1]
    if out_dtype is None:
        out_dtype = x.dtype

    # --- VMEM budget & generation-aware batch tiling --------------------
    vmem_bytes, num_cores = _device_info()
    w_isz = jnp.dtype(w1p.dtype).itemsize
    x_isz = jnp.dtype(x.dtype).itemsize
    o_isz = jnp.dtype(out_dtype).itemsize
    # Weights/biases are resident every step (constant index maps); count
    # them double-buffered to stay conservative.
    fixed_bytes = 2 * ((F * Hp + Hp * OPp) * w_isz + (Hp + OPp) * 4)
    # Per batch row: double-buffered x + output tiles, plus f32 intermediates
    # (h, heads) that spill to VMEM at large tiles.
    per_row_bytes = 2 * (F * x_isz + OPp * o_isz) + 4 * (Hp + OPp)
    vmem_budget = int(0.8 * vmem_bytes)

    if tb is None:
        tb = _choose_tb(B, per_row_bytes, fixed_bytes, vmem_budget, num_cores)
    assert B % tb == 0, f"batch {B} must be divisible by tile {tb}"
    assert tb == B or tb % 8 == 0, "batch tile must be full B or a multiple of 8"

    needed = fixed_bytes + tb * per_row_bytes
    vmem_limit = min(int(0.9 * vmem_bytes), max(16 << 20, 2 * needed + (4 << 20)))

    grid = (B // tb,)

    # Weights / biases replicated to every grid step (constant block index);
    # only x and the fused output are tiled along the batch axis.
    # TODO(synk): at real MLP widths that overflow v7x's 64 MiB VMEM, add
    # pipeline_mode=pl.Buffered(1) on the weight specs and/or a K-tiled
    # reduction grid axis; unnecessary at these sizes.
    in_specs = [
        pl.BlockSpec((tb, F), lambda i: (i, 0)),        # x
        pl.BlockSpec((F, Hp), lambda i: (0, 0)),        # w1 (padded)
        pl.BlockSpec((1, Hp), lambda i: (0, 0)),        # b1 (padded, f32)
        pl.BlockSpec((Hp, OPp), lambda i: (0, 0)),      # [w2 || w3] (padded)
        pl.BlockSpec((1, OPp), lambda i: (0, 0)),       # [b2 || b3] (padded, f32)
    ]
    out_specs = pl.BlockSpec((tb, OPp), lambda i: (i, 0))   # lane-dense store

    heads = pl.pallas_call(
        _mlp_kernel,
        out_shape=jax.ShapeDtypeStruct((B, OPp), out_dtype),
        grid_spec=pltpu.PrefetchScalarGridSpec(
            num_scalar_prefetch=0,
            grid=grid,
            in_specs=in_specs,
            out_specs=out_specs,
        ),
        compiler_params=pltpu.CompilerParams(
            dimension_semantics=("parallel",),
            vmem_limit_bytes=int(vmem_limit)),
    )(x, w1p, b1p, w23p, b23p)

    mu = heads[:, :O]
    log_var = heads[:, O:2 * O]
    return mu, log_var


# ----------------------------------------------------------------------
# Reference + demo
# ----------------------------------------------------------------------
def _init_linear(key, fan_in, fan_out, dtype=jnp.float32):
    """Deterministic init mimicking torch.nn.Linear's U(-1/sqrt(fan_in), +)."""
    kw, kb = jax.random.split(key)
    bound = 1.0 / jnp.sqrt(jnp.asarray(fan_in, dtype))
    w = jax.random.uniform(kw, (fan_in, fan_out), dtype, -bound, bound)  # [in, out]
    b = jax.random.uniform(kb, (fan_out,), dtype, -bound, bound)
    return w, b


def _reference_forward(x, w1, b1, w2, b2, w3, b3):
    h = jnp.maximum(x @ w1 + b1, 0.0)
    return h @ w2 + b2, h @ w3 + b3


if __name__ == "__main__":
    # Shapes consistent with the module: num_features=16, num_hidden=32,
    # num_outputs=4, batch=8.
    B, F, H, O = 8, 16, 32, 4

    key = jax.random.PRNGKey(0)
    kx, k1, k2, k3 = jax.random.split(key, 4)
    x = jax.random.normal(kx, (B, F), jnp.float32)
    w1, b1 = _init_linear(k1, F, H)
    w2, b2 = _init_linear(k2, H, O)
    w3, b3 = _init_linear(k3, H, O)
    mu_ref, lv_ref = _reference_forward(x, w1, b1, w2, b2, w3, b3)

    # --- exact f32 MXU path ---------------------------------------------
    p32 = prepare_params(w1, b1, w2, b2, w3, b3, matmul_dtype=None)
    mu, log_var = gaussian_noise_mlp_forward(x, p32)
    jax.block_until_ready((mu, log_var))
    assert mu.shape == (B, O) and log_var.shape == (B, O)
    assert jnp.allclose(mu, mu_ref, atol=1e-5, rtol=1e-5)
    assert jnp.allclose(log_var, lv_ref, atol=1e-5, rtol=1e-5)

    # --- default bf16 MXU-operand path (f32 accumulate / bias / ReLU) ----
    pbf = prepare_params(w1, b1, w2, b2, w3, b3)          # matmul_dtype=bf16
    mu_b, lv_b = gaussian_noise_mlp_forward(x, pbf)
    jax.block_until_ready((mu_b, lv_b))
    assert jnp.allclose(mu_b, mu_ref, atol=5e-2, rtol=5e-2)
    assert jnp.allclose(lv_b, lv_ref, atol=5e-2, rtol=5e-2)

    # --- larger batch (VMEM-aware / generation-aware tile selection) -----
    B2 = 32
    x2 = jax.random.normal(jax.random.PRNGKey(1), (B2, F), jnp.float32)
    mu2_ref, lv2_ref = _reference_forward(x2, w1, b1, w2, b2, w3, b3)
    mu2, lv2 = gaussian_noise_mlp_forward(x2, p32)
    jax.block_until_ready((mu2, lv2))
    assert jnp.allclose(mu2, mu2_ref, atol=1e-5, rtol=1e-5)
    assert jnp.allclose(lv2, lv2_ref, atol=1e-5, rtol=1e-5)

    # --- explicitly force a multi-step grid (tb=8 -> 4 steps) ------------
    mu3, lv3 = gaussian_noise_mlp_forward(x2, pbf, tb=8)
    jax.block_until_ready((mu3, lv3))
    assert jnp.allclose(mu3, mu2_ref, atol=5e-2, rtol=5e-2)
    assert jnp.allclose(lv3, lv2_ref, atol=5e-2, rtol=5e-2)

    # TODO(synk): GaussianNoise.loss (Gaussian NLL reduction) is not part of
    # forward(); not implemented here.
    print("KERNEL_OK")
</pallas_src>

<mosaic_0001>
module attributes {stable_mosaic.version = 11 : i64} {
  func.func @_mlp_kernel(%arg0: i32, %arg1: memref<8x16xf32, #tpu.memory_space<vmem>>, %arg2: memref<16x128xf32, #tpu.memory_space<vmem>>, %arg3: memref<1x128xf32, #tpu.memory_space<vmem>>, %arg4: memref<128x128xf32, #tpu.memory_space<vmem>>, %arg5: memref<1x128xf32, #tpu.memory_space<vmem>>, %arg6: memref<8x128xf32, #tpu.memory_space<vmem>>) attributes {dimension_semantics = [#tpu.dimension_semantics<parallel>], iteration_bounds = array<i64: 1>, scalar_prefetch = 0 : i64, scratch_operands = 0 : i64, tpu.core_type = #tpu.core_type<tc>, window_params = [{transform_indices = @transform_0, window_bounds = array<i64: 8, 16>}, {pipeline_mode = #tpu.pipeline_mode<synchronous>, transform_indices = @transform_1, window_bounds = array<i64: 16, 128>}, {pipeline_mode = #tpu.pipeline_mode<synchronous>, transform_indices = @transform_2, window_bounds = array<i64: 1, 128>}, {pipeline_mode = #tpu.pipeline_mode<synchronous>, transform_indices = @transform_3, window_bounds = array<i64: 128, 128>}, {pipeline_mode = #tpu.pipeline_mode<synchronous>, transform_indices = @transform_4, window_bounds = array<i64: 1, 128>}, {transform_indices = @transform_5, window_bounds = array<i64: 8, 128>}]} {
    %c0 = arith.constant 0 : index
    %c0_0 = arith.constant 0 : index
    %0 = vector.load %arg1[%c0, %c0_0] : memref<8x16xf32, #tpu.memory_space<vmem>>, vector<8x16xf32>
    %c0_1 = arith.constant 0 : index
    %c0_2 = arith.constant 0 : index
    %1 = vector.load %arg2[%c0_1, %c0_2] : memref<16x128xf32, #tpu.memory_space<vmem>>, vector<16x128xf32>
    %cst = arith.constant dense<0.000000e+00> : vector<8x128xf32>
    %2 = tpu.matmul %0, %1, %cst {dimension_numbers = #tpu.dot_dimension_numbers<[1], [0], [0], [1], [0, 0, 1, 1], [], []>} : vector<8x16xf32>, vector<16x128xf32>, vector<8x128xf32> -> vector<8x128xf32>
    %c0_3 = arith.constant 0 : index
    %c0_4 = arith.constant 0 : index
    %3 = vector.load %arg3[%c0_3, %c0_4] : memref<1x128xf32, #tpu.memory_space<vmem>>, vector<1x128xf32>
    %4 = vector.broadcast %3 : vector<1x128xf32> to vector<8x128xf32>
    %5 = arith.addf %2, %4 : vector<8x128xf32>
    %cst_5 = arith.constant 0.000000e+00 : f32
    %6 = vector.broadcast %cst_5 : f32 to vector<8x128xf32>
    %7 = arith.maximumf %5, %6 : vector<8x128xf32>
    %c0_6 = arith.constant 0 : index
    %c0_7 = arith.constant 0 : index
    %8 = vector.load %arg4[%c0_6, %c0_7] : memref<128x128xf32, #tpu.memory_space<vmem>>, vector<128x128xf32>
    %cst_8 = arith.constant dense<0.000000e+00> : vector<8x128xf32>
    %9 = tpu.matmul %7, %8, %cst_8 {dimension_numbers = #tpu.dot_dimension_numbers<[1], [0], [0], [1], [0, 0, 1, 1], [], []>} : vector<8x128xf32>, vector<128x128xf32>, vector<8x128xf32> -> vector<8x128xf32>
    %c0_9 = arith.constant 0 : index
    %c0_10 = arith.constant 0 : index
    %10 = vector.load %arg5[%c0_9, %c0_10] : memref<1x128xf32, #tpu.memory_space<vmem>>, vector<1x128xf32>
    %11 = vector.broadcast %10 : vector<1x128xf32> to vector<8x128xf32>
    %12 = arith.addf %9, %11 : vector<8x128xf32>
    %c0_11 = arith.constant 0 : index
    %c0_12 = arith.constant 0 : index
    %13 = vector.load %arg6[%c0_11, %c0_12] : memref<8x128xf32, #tpu.memory_space<vmem>>, vector<8x128xf32>
    tpu.vector_store %arg6[%c0_11, %c0_12], %12 {strides = array<i32>} : memref<8x128xf32, #tpu.memory_space<vmem>>, vector<8x128xf32>,
    return
  }
  func.func @transform_0(%arg0: i32) -> (i32, i32) {
    %c0_i32 = arith.constant 0 : i32
    %c0_i32_0 = arith.constant 0 : i32
    return %arg0, %c0_i32 : i32, i32
  }
  func.func @transform_1(%arg0: i32) -> (i32, i32) {
    %c0_i32 = arith.constant 0 : i32
    %c0_i32_0 = arith.constant 0 : i32
    %c0_i32_1 = arith.constant 0 : i32
    return %c0_i32, %c0_i32_0 : i32, i32
  }
  func.func @transform_2(%arg0: i32) -> (i32, i32) {
    %c0_i32 = arith.constant 0 : i32
    %c0_i32_0 = arith.constant 0 : i32
    %c0_i32_1 = arith.constant 0 : i32
    return %c0_i32, %c0_i32_0 : i32, i32
  }
  func.func @transform_3(%arg0: i32) -> (i32, i32) {
    %c0_i32 = arith.constant 0 : i32
    %c0_i32_0 = arith.constant 0 : i32
    %c0_i32_1 = arith.constant 0 : i32
    return %c0_i32, %c0_i32_0 : i32, i32
  }
  func.func @transform_4(%arg0: i32) -> (i32, i32) {
    %c0_i32 = arith.constant 0 : i32
    %c0_i32_0 = arith.constant 0 : i32
    %c0_i32_1 = arith.constant 0 : i32
    return %c0_i32, %c0_i32_0 : i32, i32
  }
  func.func @transform_5(%arg0: i32) -> (i32, i32) {
    %c0_i32 = arith.constant 0 : i32
    %c0_i32_0 = arith.constant 0 : i32
    return %arg0, %c0_i32 : i32, i32
  }
}

</mosaic_0001>

<llo_original>
// kernel: tpu_custom_call.1
$region0: #{tpu_custom_call.1}
  #allocation0 [shape = 'u32[]', space=smem, size = 0x4, offset = 0x4, fixed_abs, tag = 'smem constant byte address 0x4 - core index']
  #allocation1 [shape = 'u32[144,128]{1,0:T(1,128)}', space=vmem, size = 0x12000, scoped, tag = 'internal scratch']
  %s0 = inlined_call_operand.hbm [shape: f32[8,16], index: 0, kind: input, shape index: {}]
  %s1 = inlined_call_operand.hbm [shape: f32[16,128], index: 1, kind: input, shape index: {}]
  %s2 = inlined_call_operand.vmem [shape: f32[1,128], index: 2, kind: input, shape index: {}]
  %s3 = inlined_call_operand.hbm [shape: f32[128,128], index: 3, kind: input, shape index: {}]
  %s4 = inlined_call_operand.vmem [shape: f32[1,128], index: 4, kind: input, shape index: {}]
  %s5 = inlined_call_operand.hbm [shape: f32[8,128], index: 5, kind: output, shape index: {}]
  %s6 = sld [smem:[#allocation0]]
  $region42: #{tpu_custom_call.1} parent=0
    _
  %s8 = ssub.s32 1, %s6
  %s9 = scalar_select 0, %s8, %s6
  $region1: #{tpu_custom_call.1} parent=0
    #allocation2 [shape = 'u8[4096]{0}', space=vmem, size = 0x1000, scoped, tag = 'input window, operand 0, single buffered']
    #allocation3 [shape = 's32[1]{0}', space=sflag, size = 0x4, scoped, tag = 'scoped memory for tpu_custom_call.1']
    #allocation4 [shape = 's32[1]{0}', space=sflag, size = 0x4, scoped, tag = 'scoped memory for tpu_custom_call.1']
    #allocation5 [shape = 'u8[8192]{0}', space=vmem, size = 0x2000, scoped, tag = 'input window, operand 1, single buffered']
    #allocation6 [shape = 's32[1]{0}', space=sflag, size = 0x4, scoped, tag = 'scoped memory for tpu_custom_call.1']
    #allocation7 [shape = 'u8[65536]{0}', space=vmem, size = 0x10000, scoped, tag = 'input window, operand 3, single buffered']
    #allocation8 [shape = 'u8[4096]{0}', space=vmem, size = 0x1000, scoped, tag = 'output window, operand 0, single buffered']
    %10 = vsyncpa [#allocation3], 0
    %11 = vsyncpa [#allocation6], 0
    %12 = vsyncpa [#allocation4], 0
    // Predicated region
    $region2: #{tpu_custom_call.1} parent=1 // pred_check
      _
    $region3: #{tpu_custom_call.1} parent=1 // pred_check_branch
      %14 = sbr.rel (0) target = $region5
    $region4: #{tpu_custom_call.1} parent=1 // pred_region
      %s16 = ssub.s32 128, 128
      %17 = vsyncadd [#allocation3], %s16
      %s19 = sshll.u32 [#allocation2], 4
      %s20 = int_to_ptr.vmem [resolvable:$true] %s19
      %22 = dma.hbm_to_vmem [thread:$0]  %s0, 128, %s20, [#allocation3]
    $region5: #{tpu_custom_call.1} parent=1 // pred_fallthru
      _
    // Predicated region
    $region6: #{tpu_custom_call.1} parent=1 // pred_check
      _
    $region7: #{tpu_custom_call.1} parent=1 // pred_check_branch
      %24 = sbr.rel (0) target = $region9
    $region8: #{tpu_custom_call.1} parent=1 // pred_region
      %s26 = ssub.s32 256, 256
      %27 = vsyncadd [#allocation6], %s26
      %s28 = sshll.u32 [#allocation5], 4
      %s29 = int_to_ptr.vmem [resolvable:$true] %s28
      %34 = dma.hbm_to_vmem [thread:$0]  %s1, 256, %s29, [#allocation6], 128, 128, 8
    $region9: #{tpu_custom_call.1} parent=1 // pred_fallthru
      _
    // Predicated region
    $region10: #{tpu_custom_call.1} parent=1 // pred_check
      _
    $region11: #{tpu_custom_call.1} parent=1 // pred_check_branch
      %36 = sbr.rel (0) target = $region13
    $region12: #{tpu_custom_call.1} parent=1 // pred_region
      _
    $region13: #{tpu_custom_call.1} parent=1 // pred_fallthru
      _
    // Predicated region
    $region14: #{tpu_custom_call.1} parent=1 // pred_check
      _
    $region15: #{tpu_custom_call.1} parent=1 // pred_check_branch
      %38 = sbr.rel (0) target = $region17
    $region16: #{tpu_custom_call.1} parent=1 // pred_region
      %s40 = ssub.s32 2048, 2048
      %41 = vsyncadd [#allocation6], %s40
      %s42 = sshll.u32 [#allocation7], 4
      %s43 = int_to_ptr.vmem [resolvable:$true] %s42
      %48 = dma.hbm_to_vmem [thread:$0]  %s3, 2048, %s43, [#allocation6], 128, 128, 8
    $region17: #{tpu_custom_call.1} parent=1 // pred_fallthru
      _
    // Predicated region
    $region18: #{tpu_custom_call.1} parent=1 // pred_check
      _
    $region19: #{tpu_custom_call.1} parent=1 // pred_check_branch
      %50 = sbr.rel (0) target = $region21
    $region20: #{tpu_custom_call.1} parent=1 // pred_region
      _
    $region21: #{tpu_custom_call.1} parent=1 // pred_fallthru
      _
    // Predicated region
    $region22: #{tpu_custom_call.1} parent=1 // pred_check
      _
    $region23: #{tpu_custom_call.1} parent=1 // pred_check_branch
      %52 = sbr.rel (0) target = $region25
    $region24: #{tpu_custom_call.1} parent=1 // pred_region
      %53 = dma.done [#allocation3], 128
    $region25: #{tpu_custom_call.1} parent=1 // pred_fallthru
      _
    // Predicated region
    $region26: #{tpu_custom_call.1} parent=1 // pred_check
      _
    $region27: #{tpu_custom_call.1} parent=1 // pred_check_branch
      %55 = sbr.rel (0) target = $region29
    $region28: #{tpu_custom_call.1} parent=1 // pred_region
      %56 = dma.done [#allocation6], 256
    $region29: #{tpu_custom_call.1} parent=1 // pred_fallthru
      _
    // Predicated region
    $region30: #{tpu_custom_call.1} parent=1 // pred_check
      _
    $region31: #{tpu_custom_call.1} parent=1 // pred_check_branch
      %58 = sbr.rel (0) target = $region33
    $region32: #{tpu_custom_call.1} parent=1 // pred_region
      %59 = dma.done [#allocation6], 2048
    $region33: #{tpu_custom_call.1} parent=1 // pred_fallthru
      _
    %v60 = vld [vmem:[#allocation2] sm:$0xff]
    %v61 = vld [vmem:[#allocation5] sm:$0xff]
    %v62 = vld [vmem:[#allocation5 + $0x8] sm:$0xff]
    %v63 = vld [vmem:[%s2] sm:$0x1]
    %v65 = vlaneseq
    %v66 = vshrl.u32 %v65, 7
    %v67 = vsub.s32 0, %v66
    %v68 = vrot.slane %v63, %v67
    %vm70 = vcmask 130048
    %v72 = vsel %vm70, %v60, 0
    %74 = vmatprep.subr.mxu0 0.0
    %75 = vmatpush1.msra.mxu0 0.0
    %76 = vmatprep.subr.mxu0 0.0
    %77 = vmatpush1.msra.mxu0 0.0
    %78 = vmatprep.subr.mxu0 0.0
    %79 = vmatpush1.msra.mxu0 0.0
    %80 = vmatprep.subr.mxu0 0.0
    %81 = vmatpush1.msra.mxu0 0.0
    %82 = vmatprep.subr.mxu0 0.0
    %83 = vmatpush1.msra.mxu0 0.0
    %84 = vmatprep.subr.mxu0 0.0
    %85 = vmatpush1.msra.mxu0 0.0
    %86 = vmatprep.subr.mxu0 0.0
    %87 = vmatpush1.msra.mxu0 0.0
    %88 = vmatprep.subr.mxu0 0.0
    %89 = vmatpush1.msra.mxu0 0.0
    %90 = vmatprep.subr.mxu0 0.0
    %91 = vmatpush1.msra.mxu0 0.0
    %92 = vmatprep.subr.mxu0 0.0
    %93 = vmatpush1.msra.mxu0 0.0
    %94 = vmatprep.subr.mxu0 0.0
    %95 = vmatpush1.msra.mxu0 0.0
    %96 = vmatprep.subr.mxu0 0.0
    %97 = vmatpush1.msra.mxu0 0.0
    %98 = vmatprep.subr.mxu0 0.0
    %99 = vmatpush1.msra.mxu0 0.0
    %100 = vmatprep.subr.mxu0 0.0
    %101 = vmatpush1.msra.mxu0 0.0
    %102 = vmatprep.subr.mxu0 0.0
    %103 = vmatpush1.msra.mxu0 %v62
    %104 = vmatprep.subr.mxu0 0.0
    %105 = vmatpush1.msra.mxu0 %v61
    %106 = vmatprep.subr.mxu0 0.0
    %107 = vmatpush2.msra.mxu0 0.0
    %108 = vmatprep.subr.mxu0 0.0
    %109 = vmatpush2.msra.mxu0 0.0
    %110 = vmatprep.subr.mxu0 0.0
    %111 = vmatpush2.msra.mxu0 0.0
    %112 = vmatprep.subr.mxu0 0.0
    %113 = vmatpush2.msra.mxu0 0.0
    %114 = vmatprep.subr.mxu0 0.0
    %115 = vmatpush2.msra.mxu0 0.0
    %116 = vmatprep.subr.mxu0 0.0
    %117 = vmatpush2.msra.mxu0 0.0
    %118 = vmatprep.subr.mxu0 0.0
    %119 = vmatpush2.msra.mxu0 0.0
    %120 = vmatprep.subr.mxu0 0.0
    %121 = vmatpush2.msra.mxu0 0.0
    %122 = vmatprep.subr.mxu0 0.0
    %123 = vmatpush2.msra.mxu0 0.0
    %124 = vmatprep.subr.mxu0 0.0
    %125 = vmatpush2.msra.mxu0 0.0
    %126 = vmatprep.subr.mxu0 0.0
    %127 = vmatpush2.msra.mxu0 0.0
    %128 = vmatprep.subr.mxu0 0.0
    %129 = vmatpush2.msra.mxu0 0.0
    %130 = vmatprep.subr.mxu0 0.0
    %131 = vmatpush2.msra.mxu0 0.0
    %132 = vmatprep.subr.mxu0 0.0
    %133 = vmatpush2.msra.mxu0 0.0
    %134 = vmatprep.subr.mxu0 0.0
    %135 = vmatpush2.msra.mxu0 0.0
    %136 = vmatprep.subr.mxu0 0.0
    %137 = vmatpush2.msra.mxu0 0.0
    %138 = vmatprep.mubr.f32.mxu0 0.0
    %139 = vmatmul.mubr.f32.gmra.mxu0 %v72
    %v140 = vpop.f32.mrf.mxu0
    %v141 = vadd.f32 %v68, %v140
    %v142 = vpop.f32.mrf.mxu0
    %143 = vdwg.mxu0
    %v144 = vmax.f32 %v141, 0.0
    %v145 = vld [vmem:[#allocation7] sm:$0xff]
    %v146 = vld [vmem:[#allocation7 + $0x8] sm:$0xff]
    %v147 = vld [vmem:[#allocation7 + $0x10] sm:$0xff]
    %v148 = vld [vmem:[#allocation7 + $0x18] sm:$0xff]
    %v149 = vld [vmem:[#allocation7 + $0x20] sm:$0xff]
    %v150 = vld [vmem:[#allocation7 + $0x28] sm:$0xff]
    %v151 = vld [vmem:[#allocation7 + $0x30] sm:$0xff]
    %v152 = vld [vmem:[#allocation7 + $0x38] sm:$0xff]
    %v153 = vld [vmem:[#allocation7 + $0x40] sm:$0xff]
    %v154 = vld [vmem:[#allocation7 + $0x48] sm:$0xff]
    %v155 = vld [vmem:[#allocation7 + $0x50] sm:$0xff]
    %v156 = vld [vmem:[#allocation7 + $0x58] sm:$0xff]
    %v157 = vld [vmem:[#allocation7 + $0x60] sm:$0xff]
    %v158 = vld [vmem:[#allocation7 + $0x68] sm:$0xff]
    %v159 = vld [vmem:[#allocation7 + $0x70] sm:$0xff]
    %v160 = vld [vmem:[#allocation7 + $0x78] sm:$0xff]
    %v161 = vld [vmem:[%s4] sm:$0x1]
    %v163 = vlaneseq
    %v164 = vshrl.u32 %v163, 7
    %v165 = vsub.s32 0, %v164
    %v166 = vrot.slane %v161, %v165
    %168 = vmatprep.subr.mxu0 0.0
    %169 = vmatpush1.msra.mxu0 %v160
    %170 = vmatprep.subr.mxu0 0.0
    %171 = vmatpush1.msra.mxu0 %v159
    %172 = vmatprep.subr.mxu0 0.0
    %173 = vmatpush1.msra.mxu0 %v158
    %174 = vmatprep.subr.mxu0 0.0
    %175 = vmatpush1.msra.mxu0 %v157
    %176 = vmatprep.subr.mxu0 0.0
    %177 = vmatpush1.msra.mxu0 %v156
    %178 = vmatprep.subr.mxu0 0.0
    %179 = vmatpush1.msra.mxu0 %v155
    %180 = vmatprep.subr.mxu0 0.0
    %181 = vmatpush1.msra.mxu0 %v154
    %182 = vmatprep.subr.mxu0 0.0
    %183 = vmatpush1.msra.mxu0 %v153
    %184 = vmatprep.subr.mxu0 0.0
    %185 = vmatpush1.msra.mxu0 %v152
    %186 = vmatprep.subr.mxu0 0.0
    %187 = vmatpush1.msra.mxu0 %v151
    %188 = vmatprep.subr.mxu0 0.0
    %189 = vmatpush1.msra.mxu0 %v150
    %190 = vmatprep.subr.mxu0 0.0
    %191 = vmatpush1.msra.mxu0 %v149
    %192 = vmatprep.subr.mxu0 0.0
    %193 = vmatpush1.msra.mxu0 %v148
    %194 = vmatprep.subr.mxu0 0.0
    %195 = vmatpush1.msra.mxu0 %v147
    %196 = vmatprep.subr.mxu0 0.0
    %197 = vmatpush1.msra.mxu0 %v146
    %198 = vmatprep.subr.mxu0 0.0
    %199 = vmatpush1.msra.mxu0 %v145
    %200 = vmatprep.subr.mxu0 0.0
    %201 = vmatpush2.msra.mxu0 0.0
    %202 = vmatprep.subr.mxu0 0.0
    %203 = vmatpush2.msra.mxu0 0.0
    %204 = vmatprep.subr.mxu0 0.0
    %205 = vmatpush2.msra.mxu0 0.0
    %206 = vmatprep.subr.mxu0 0.0
    %207 = vmatpush2.msra.mxu0 0.0
    %208 = vmatprep.subr.mxu0 0.0
    %209 = vmatpush2.msra.mxu0 0.0
    %210 = vmatprep.subr.mxu0 0.0
    %211 = vmatpush2.msra.mxu0 0.0
    %212 = vmatprep.subr.mxu0 0.0
    %213 = vmatpush2.msra.mxu0 0.0
    %214 = vmatprep.subr.mxu0 0.0
    %215 = vmatpush2.msra.mxu0 0.0
    %216 = vmatprep.subr.mxu0 0.0
    %217 = vmatpush2.msra.mxu0 0.0
    %218 = vmatprep.subr.mxu0 0.0
    %219 = vmatpush2.msra.mxu0 0.0
    %220 = vmatprep.subr.mxu0 0.0
    %221 = vmatpush2.msra.mxu0 0.0
    %222 = vmatprep.subr.mxu0 0.0
    %223 = vmatpush2.msra.mxu0 0.0
    %224 = vmatprep.subr.mxu0 0.0
    %225 = vmatpush2.msra.mxu0 0.0
    %226 = vmatprep.subr.mxu0 0.0
    %227 = vmatpush2.msra.mxu0 0.0
    %228 = vmatprep.subr.mxu0 0.0
    %229 = vmatpush2.msra.mxu0 0.0
    %230 = vmatprep.subr.mxu0 0.0
    %231 = vmatpush2.msra.mxu0 0.0
    %232 = vmatprep.mubr.f32.mxu0 0.0
    %233 = vmatmul.mubr.f32.gmra.mxu0 %v144
    %v234 = vpop.f32.mrf.mxu0
    %v235 = vadd.f32 %v166, %v234
    %v236 = vpop.f32.mrf.mxu0
    %237 = vdwg.mxu0
    %238 = vst [vmem:[#allocation8] sm:$0xff] %v235
    // Predicated region
    $region34: #{tpu_custom_call.1} parent=1 // pred_check
      _
    $region35: #{tpu_custom_call.1} parent=1 // pred_check_branch
      %240 = sbr.rel (0) target = $region37
    $region36: #{tpu_custom_call.1} parent=1 // pred_region
      %s242 = ssub.s32 128, 128
      %243 = vsyncadd [#allocation4], %s242
      %s245 = sshll.u32 [#allocation8], 4
      %s246 = int_to_ptr.vmem [resolvable:$true] %s245
      %248 = dma.vmem_to_hbm [thread:$0]  %s246, 128, %s5, [#allocation4]
    $region37: #{tpu_custom_call.1} parent=1 // pred_fallthru
      _
    // Predicated region
    $region38: #{tpu_custom_call.1} parent=1 // pred_check
      _
    $region39: #{tpu_custom_call.1} parent=1 // pred_check_branch
      %250 = sbr.rel (0) target = $region41
    $region40: #{tpu_custom_call.1} parent=1 // pred_region
      %251 = dma.done [#allocation4], 128
    $region41: #{tpu_custom_call.1} parent=1 // pred_fallthru
      _
    %252 = vsyncpa [#allocation3], 1
    %253 = vsyncpa [#allocation6], 1
    %254 = vsyncpa [#allocation4], 1

</llo_original>
